<compile_context>
chip_gen: v5e
topology: v5e:2x2
jax: 0.10.0
libtpu: 0.0.40
codegen_flags: <defaults>
</compile_context>

<pallas_src>
import functools

import jax
import jax.numpy as jnp
from jax.experimental import pallas as pl
from jax.experimental.pallas import tpu as pltpu

N_IN = 6
N_OUT = 5
N_NODES = 64
N_HIDDEN_LAYERS = 2          # -> Linear(6,64), Tanh, Linear(64,64), Tanh, Linear(64,5)

SUBLANE = 8                  # batch tile must be a multiple of 8 (sublane)
DEFAULT_BLOCK_ROWS = 8192    # batch-tile cap; big enough to amortize ~0.35us/step

# Worst-case lane-padded VMEM per batch row (bytes):
#   x block (TB,6)->(TB,128) f32, double buffered            : 2 * 512
#   out block (TB,5)->(TB,128) f32, double buffered           : 2 * 512
#   live hidden / branch temporaries, each padded to 128 lanes : ~4 * 512
_VMEM_BYTES_PER_ROW = 5 * 1024


def _round_up(n, m):
    return ((n + m - 1) // m) * m


def res_net_kernel(x_ref, wlin_ref, w1_ref, w2_ref, w3_ref, b_ref, o_ref, *,
                   use_bf16=False):
    """One batch tile: out = x @ Wlin + (tanh(tanh(x W1 + b1) W2 + b2) W3 + b3)."""
    x = x_ref[...]                      # (TB, N_IN)
    b = b_ref[...]                      # (3, N_NODES): rows = b1, b2, b3(padded)
    b1 = b[0:1, :]                      # (1, N_NODES)
    b2 = b[1:2, :]                      # (1, N_NODES)
    b3 = b[2:3, :N_OUT]                 # (1, N_OUT)

    if use_bf16:
        # bf16 MXU path (v6e/v7x): ~3-4x faster f32 matmul passes, half the
        # activation VMEM; accuracy ~1e-3 relative.
        def dot(a, w):
            return jnp.dot(a.astype(jnp.bfloat16), w.astype(jnp.bfloat16),
                           preferred_element_type=jnp.float32)
    else:
        # Full-f32 MXU passes for parity with PyTorch float32.
        def dot(a, w):
            return jnp.dot(a, w, preferred_element_type=jnp.float32,
                           precision=jax.lax.Precision.HIGHEST)

    # linear (skip) branch, no bias
    lin = dot(x, wlin_ref[...])
    # nonlinear branch: Linear -> tanh -> Linear -> tanh -> Linear
    h = jnp.tanh(dot(x, w1_ref[...]) + b1)
    h = jnp.tanh(dot(h, w2_ref[...]) + b2)
    nonlin = dot(h, w3_ref[...]) + b3

    o_ref[...] = (lin + nonlin).astype(o_ref.dtype)


@functools.partial(jax.jit, static_argnames=("block_rows", "use_bf16"))
def simple_res_net_forward(x, packed, block_rows=DEFAULT_BLOCK_ROWS,
                           use_bf16=False):
    """x: (B, N_IN) float32.  packed: output of pack_params (weights transposed)."""
    B = x.shape[0]

    # Batch tile: multiple of 8, capped by block_rows, and chosen so large
    # batches always yield >= 2 grid steps (keeps both v7x TensorCores busy).
    half = _round_up(max((B + 1) // 2, 1), SUBLANE)
    TB = max(SUBLANE, min(block_rows, half))
    grid = pl.cdiv(B, TB)               # partial last block; no host pad/slice

    # Lane-padded VMEM budget for the chosen tile (32..56 MiB: above v5e's
    # 16 MiB scoped default, below v7x's 64 MiB physical).
    vmem_limit = int(min(56 << 20,
                         max(32 << 20, TB * _VMEM_BYTES_PER_ROW + (4 << 20))))

    kernel = functools.partial(res_net_kernel, use_bf16=use_bf16)

    out = pl.pallas_call(
        kernel,
        out_shape=jax.ShapeDtypeStruct((B, N_OUT), jnp.float32),
        grid=(grid,),
        in_specs=[
            pl.BlockSpec((TB, N_IN), lambda i: (i, 0)),          # x: batch-tiled
            pl.BlockSpec((N_IN, N_OUT), lambda i: (0, 0)),       # w_lin  (6,5)
            pl.BlockSpec((N_IN, N_NODES), lambda i: (0, 0)),     # w1     (6,64)
            pl.BlockSpec((N_NODES, N_NODES), lambda i: (0, 0)),  # w2     (64,64)
            pl.BlockSpec((N_NODES, N_OUT), lambda i: (0, 0)),    # w3     (64,5)
            pl.BlockSpec((3, N_NODES), lambda i: (0, 0)),        # packed biases
        ],
        out_specs=pl.BlockSpec((TB, N_OUT), lambda i: (i, 0)),
        compiler_params=pltpu.CompilerParams(
            dimension_semantics=("parallel",),                   # megacore split
            vmem_limit_bytes=vmem_limit),
    )(x, packed["w_lin"], packed["w1"], packed["w2"], packed["w3"],
      packed["bias"])

    return out


def init_params(key):
    """Deterministic PyTorch-default-style init (uniform +/- 1/sqrt(fan_in)).
    All weights stored as (in_features, out_features)."""
    ks = jax.random.split(key, 7)

    def u(k, shape, fan_in):
        bound = 1.0 / jnp.sqrt(jnp.float32(fan_in))
        return jax.random.uniform(k, shape, jnp.float32, -bound, bound)

    return {
        "w_lin": u(ks[0], (N_IN, N_OUT), N_IN),          # net_lin (bias=False)
        "w1": u(ks[1], (N_IN, N_NODES), N_IN),           # Linear(6,64)
        "b1": u(ks[2], (N_NODES,), N_IN),
        "w2": u(ks[3], (N_NODES, N_NODES), N_NODES),     # Linear(64,64)
        "b2": u(ks[4], (N_NODES,), N_NODES),
        "w3": u(ks[5], (N_NODES, N_OUT), N_NODES),       # Linear(64,5)
        "b3": u(ks[6], (N_OUT,), N_NODES),
    }


def pack_params(params):
    """One-time packing, hoisted out of the per-call forward."""
    b3_row = jnp.zeros((N_NODES,), jnp.float32).at[:N_OUT].set(params["b3"])
    bias = jnp.stack([params["b1"], params["b2"], b3_row], axis=0)  # (3, 64)
    return {
        "w_lin": params["w_lin"],
        "w1": params["w1"],
        "w2": params["w2"],
        "w3": params["w3"],
        "bias": bias,
    }


def reference_forward(x, p):
    hp = jax.lax.Precision.HIGHEST
    lin = jnp.dot(x, p["w_lin"], precision=hp)
    h = jnp.tanh(jnp.dot(x, p["w1"], precision=hp) + p["b1"])
    h = jnp.tanh(jnp.dot(h, p["w2"], precision=hp) + p["b2"])
    return lin + jnp.dot(h, p["w3"], precision=hp) + p["b3"]


if __name__ == "__main__":
    key = jax.random.PRNGKey(0)
    kx, kp = jax.random.split(key)

    params = init_params(kp)
    packed = pack_params(params)           # done once, not per forward call

    # B=8: single tile.  B=1000: two grid steps with a partial last block
    # (exercises the no-host-pad / masked-edge path).
    for B in (8, 1000):
        x = jax.random.normal(jax.random.fold_in(kx, B), (B, N_IN), jnp.float32)

        out = simple_res_net_forward(x, packed)
        out = jax.block_until_ready(out)

        ref = reference_forward(x, params)
        assert out.shape == (B, N_OUT), out.shape
        assert jnp.allclose(out, ref, atol=1e-5, rtol=1e-5), (
            f"B={B} max abs err {jnp.max(jnp.abs(out - ref))}")

    print("KERNEL_OK")
</pallas_src>

<mosaic_0001>
module attributes {stable_mosaic.version = 11 : i64} {
  func.func @res_net_kernel(%arg0: i32, %arg1: memref<8x6xf32, #tpu.memory_space<vmem>>, %arg2: memref<6x5xf32, #tpu.memory_space<vmem>>, %arg3: memref<6x64xf32, #tpu.memory_space<vmem>>, %arg4: memref<64x64xf32, #tpu.memory_space<vmem>>, %arg5: memref<64x5xf32, #tpu.memory_space<vmem>>, %arg6: memref<3x64xf32, #tpu.memory_space<vmem>>, %arg7: memref<8x5xf32, #tpu.memory_space<vmem>>) attributes {dimension_semantics = [#tpu.dimension_semantics<parallel>], iteration_bounds = array<i64: 1>, scalar_prefetch = 0 : i64, scratch_operands = 0 : i64, tpu.core_type = #tpu.core_type<tc>, window_params = [{transform_indices = @transform_0, window_bounds = array<i64: 8, 6>}, {pipeline_mode = #tpu.pipeline_mode<synchronous>, transform_indices = @transform_1, window_bounds = array<i64: 6, 5>}, {pipeline_mode = #tpu.pipeline_mode<synchronous>, transform_indices = @transform_2, window_bounds = array<i64: 6, 64>}, {pipeline_mode = #tpu.pipeline_mode<synchronous>, transform_indices = @transform_3, window_bounds = array<i64: 64, 64>}, {pipeline_mode = #tpu.pipeline_mode<synchronous>, transform_indices = @transform_4, window_bounds = array<i64: 64, 5>}, {pipeline_mode = #tpu.pipeline_mode<synchronous>, transform_indices = @transform_5, window_bounds = array<i64: 3, 64>}, {transform_indices = @transform_6, window_bounds = array<i64: 8, 5>}]} {
    %c0 = arith.constant 0 : index
    %c0_0 = arith.constant 0 : index
    %0 = vector.load %arg1[%c0, %c0_0] : memref<8x6xf32, #tpu.memory_space<vmem>>, vector<8x6xf32>
    %c0_1 = arith.constant 0 : index
    %c0_2 = arith.constant 0 : index
    %1 = vector.load %arg6[%c0_1, %c0_2] : memref<3x64xf32, #tpu.memory_space<vmem>>, vector<3x64xf32>
    %2 = vector.extract_strided_slice %1 {offsets = [0, 0], sizes = [1, 64], strides = [1, 1]} : vector<3x64xf32> to vector<1x64xf32>
    %3 = vector.extract_strided_slice %1 {offsets = [1, 0], sizes = [1, 64], strides = [1, 1]} : vector<3x64xf32> to vector<1x64xf32>
    %4 = vector.extract_strided_slice %1 {offsets = [2, 0], sizes = [1, 5], strides = [1, 1]} : vector<3x64xf32> to vector<1x5xf32>
    %c0_3 = arith.constant 0 : index
    %c0_4 = arith.constant 0 : index
    %5 = vector.load %arg2[%c0_3, %c0_4] : memref<6x5xf32, #tpu.memory_space<vmem>>, vector<6x5xf32>
    %cst = arith.constant dense<0.000000e+00> : vector<8x5xf32>
    %6 = tpu.matmul %0, %5, %cst {dimension_numbers = #tpu.dot_dimension_numbers<[1], [0], [0], [1], [0, 0, 1, 1], [], []>, precision = #tpu.contract_precision<fp32>} : vector<8x6xf32>, vector<6x5xf32>, vector<8x5xf32> -> vector<8x5xf32>
    %c0_5 = arith.constant 0 : index
    %c0_6 = arith.constant 0 : index
    %7 = vector.load %arg3[%c0_5, %c0_6] : memref<6x64xf32, #tpu.memory_space<vmem>>, vector<6x64xf32>
    %cst_7 = arith.constant dense<0.000000e+00> : vector<8x64xf32>
    %8 = tpu.matmul %0, %7, %cst_7 {dimension_numbers = #tpu.dot_dimension_numbers<[1], [0], [0], [1], [0, 0, 1, 1], [], []>, precision = #tpu.contract_precision<fp32>} : vector<8x6xf32>, vector<6x64xf32>, vector<8x64xf32> -> vector<8x64xf32>
    %9 = vector.broadcast %2 : vector<1x64xf32> to vector<8x64xf32>
    %10 = arith.addf %8, %9 : vector<8x64xf32>
    %11 = math.tanh %10 : vector<8x64xf32>
    %c0_8 = arith.constant 0 : index
    %c0_9 = arith.constant 0 : index
    %12 = vector.load %arg4[%c0_8, %c0_9] : memref<64x64xf32, #tpu.memory_space<vmem>>, vector<64x64xf32>
    %cst_10 = arith.constant dense<0.000000e+00> : vector<8x64xf32>
    %13 = tpu.matmul %11, %12, %cst_10 {dimension_numbers = #tpu.dot_dimension_numbers<[1], [0], [0], [1], [0, 0, 1, 1], [], []>, precision = #tpu.contract_precision<fp32>} : vector<8x64xf32>, vector<64x64xf32>, vector<8x64xf32> -> vector<8x64xf32>
    %14 = vector.broadcast %3 : vector<1x64xf32> to vector<8x64xf32>
    %15 = arith.addf %13, %14 : vector<8x64xf32>
    %16 = math.tanh %15 : vector<8x64xf32>
    %c0_11 = arith.constant 0 : index
    %c0_12 = arith.constant 0 : index
    %17 = vector.load %arg5[%c0_11, %c0_12] : memref<64x5xf32, #tpu.memory_space<vmem>>, vector<64x5xf32>
    %cst_13 = arith.constant dense<0.000000e+00> : vector<8x5xf32>
    %18 = tpu.matmul %16, %17, %cst_13 {dimension_numbers = #tpu.dot_dimension_numbers<[1], [0], [0], [1], [0, 0, 1, 1], [], []>, precision = #tpu.contract_precision<fp32>} : vector<8x64xf32>, vector<64x5xf32>, vector<8x5xf32> -> vector<8x5xf32>
    %19 = vector.broadcast %4 : vector<1x5xf32> to vector<8x5xf32>
    %20 = arith.addf %18, %19 : vector<8x5xf32>
    %21 = arith.addf %6, %20 : vector<8x5xf32>
    %c0_14 = arith.constant 0 : index
    %c0_15 = arith.constant 0 : index
    %22 = vector.load %arg7[%c0_14, %c0_15] : memref<8x5xf32, #tpu.memory_space<vmem>>, vector<8x5xf32>
    tpu.vector_store %arg7[%c0_14, %c0_15], %21 {strides = array<i32>} : memref<8x5xf32, #tpu.memory_space<vmem>>, vector<8x5xf32>,
    return
  }
  func.func @transform_0(%arg0: i32) -> (i32, i32) {
    %c0_i32 = arith.constant 0 : i32
    %c0_i32_0 = arith.constant 0 : i32
    return %arg0, %c0_i32 : i32, i32
  }
  func.func @transform_1(%arg0: i32) -> (i32, i32) {
    %c0_i32 = arith.constant 0 : i32
    %c0_i32_0 = arith.constant 0 : i32
    %c0_i32_1 = arith.constant 0 : i32
    return %c0_i32, %c0_i32_0 : i32, i32
  }
  func.func @transform_2(%arg0: i32) -> (i32, i32) {
    %c0_i32 = arith.constant 0 : i32
    %c0_i32_0 = arith.constant 0 : i32
    %c0_i32_1 = arith.constant 0 : i32
    return %c0_i32, %c0_i32_0 : i32, i32
  }
  func.func @transform_3(%arg0: i32) -> (i32, i32) {
    %c0_i32 = arith.constant 0 : i32
    %c0_i32_0 = arith.constant 0 : i32
    %c0_i32_1 = arith.constant 0 : i32
    return %c0_i32, %c0_i32_0 : i32, i32
  }
  func.func @transform_4(%arg0: i32) -> (i32, i32) {
    %c0_i32 = arith.constant 0 : i32
    %c0_i32_0 = arith.constant 0 : i32
    %c0_i32_1 = arith.constant 0 : i32
    return %c0_i32, %c0_i32_0 : i32, i32
  }
  func.func @transform_5(%arg0: i32) -> (i32, i32) {
    %c0_i32 = arith.constant 0 : i32
    %c0_i32_0 = arith.constant 0 : i32
    %c0_i32_1 = arith.constant 0 : i32
    return %c0_i32, %c0_i32_0 : i32, i32
  }
  func.func @transform_6(%arg0: i32) -> (i32, i32) {
    %c0_i32 = arith.constant 0 : i32
    %c0_i32_0 = arith.constant 0 : i32
    return %arg0, %c0_i32 : i32, i32
  }
}

</mosaic_0001>

<llo_original>
// kernel: simple_res_net_forward.1
$region0: #{simple_res_net_forward.1}
  #allocation0 [shape = 'u32[]', space=smem, size = 0x4, offset = 0x4, fixed_abs, tag = 'smem constant byte address 0x4 - core index']
  #allocation1 [shape = 'u32[72,128]{1,0:T(1,128)}', space=vmem, size = 0x9000, scoped, tag = 'internal scratch']
  %s0 = inlined_call_operand.vmem [shape: f32[8,6], index: 0, kind: input, shape index: {}]
  %s1 = inlined_call_operand.hbm [shape: f32[6,5], index: 1, kind: input, shape index: {}]
  %s2 = inlined_call_operand.hbm [shape: f32[6,64], index: 2, kind: input, shape index: {}]
  %s3 = inlined_call_operand.vmem [shape: f32[64,64], index: 3, kind: input, shape index: {}]
  %s4 = inlined_call_operand.vmem [shape: f32[64,5], index: 4, kind: input, shape index: {}]
  %s5 = inlined_call_operand.hbm [shape: f32[3,64], index: 5, kind: input, shape index: {}]
  %s6 = inlined_call_operand.hbm [shape: f32[8,5], index: 6, kind: output, shape index: {}]
  %s7 = sld [smem:[#allocation0]]
  $region46: #{simple_res_net_forward.1} parent=0
    _
  %s9 = ssub.s32 1, %s7
  %s10 = scalar_select 0, %s9, %s7
  $region1: #{simple_res_net_forward.1} parent=0
    #allocation2 [shape = 'u8[4096]{0}', space=vmem, size = 0x1000, scoped, tag = 'input window, operand 1, single buffered']
    #allocation3 [shape = 's32[1]{0}', space=sflag, size = 0x4, scoped, tag = 'scoped memory for simple_res_net_forward.1']
    #allocation4 [shape = 's32[1]{0}', space=sflag, size = 0x4, scoped, tag = 'scoped memory for simple_res_net_forward.1']
    #allocation5 [shape = 'u8[4096]{0}', space=vmem, size = 0x1000, scoped, tag = 'input window, operand 2, single buffered']
    #allocation6 [shape = 's32[1]{0}', space=sflag, size = 0x4, scoped, tag = 'scoped memory for simple_res_net_forward.1']
    #allocation7 [shape = 'u8[2048]{0}', space=vmem, size = 0x800, scoped, tag = 'input window, operand 5, single buffered']
    #allocation8 [shape = 'u8[4096]{0}', space=vmem, size = 0x1000, scoped, tag = 'output window, operand 0, single buffered']
    %11 = vsyncpa [#allocation3], 0
    %12 = vsyncpa [#allocation6], 0
    %13 = vsyncpa [#allocation4], 0
    // Predicated region
    $region2: #{simple_res_net_forward.1} parent=1 // pred_check
      _
    $region3: #{simple_res_net_forward.1} parent=1 // pred_check_branch
      %15 = sbr.rel (0) target = $region5
    $region4: #{simple_res_net_forward.1} parent=1 // pred_region
      _
    $region5: #{simple_res_net_forward.1} parent=1 // pred_fallthru
      _
    // Predicated region
    $region6: #{simple_res_net_forward.1} parent=1 // pred_check
      _
    $region7: #{simple_res_net_forward.1} parent=1 // pred_check_branch
      %17 = sbr.rel (0) target = $region9
    $region8: #{simple_res_net_forward.1} parent=1 // pred_region
      %19 = vsyncadd [#allocation3], 0
      %s21 = sshll.u32 %s1, 4
      %s22 = int_to_ptr.hbm [resolvable:$true] %s21
      %s23 = sshll.u32 [#allocation2], 4
      %s24 = int_to_ptr.vmem [resolvable:$true] %s23
      %26 = dma.hbm_to_vmem [thread:$0]  %s22, 128, %s24, [#allocation3]
    $region9: #{simple_res_net_forward.1} parent=1 // pred_fallthru
      _
    // Predicated region
    $region10: #{simple_res_net_forward.1} parent=1 // pred_check
      _
    $region11: #{simple_res_net_forward.1} parent=1 // pred_check_branch
      %28 = sbr.rel (0) target = $region13
    $region12: #{simple_res_net_forward.1} parent=1 // pred_region
      %30 = vsyncadd [#allocation6], 0
      %s32 = sshll.u32 %s2, 4
      %s33 = int_to_ptr.hbm [resolvable:$true] %s32
      %s34 = sshll.u32 [#allocation5], 4
      %s35 = int_to_ptr.vmem [resolvable:$true] %s34
      %37 = dma.hbm_to_vmem [thread:$0]  %s33, 128, %s35, [#allocation6]
    $region13: #{simple_res_net_forward.1} parent=1 // pred_fallthru
      _
    // Predicated region
    $region14: #{simple_res_net_forward.1} parent=1 // pred_check
      _
    $region15: #{simple_res_net_forward.1} parent=1 // pred_check_branch
      %39 = sbr.rel (0) target = $region17
    $region16: #{simple_res_net_forward.1} parent=1 // pred_region
      _
    $region17: #{simple_res_net_forward.1} parent=1 // pred_fallthru
      _
    // Predicated region
    $region18: #{simple_res_net_forward.1} parent=1 // pred_check
      _
    $region19: #{simple_res_net_forward.1} parent=1 // pred_check_branch
      %41 = sbr.rel (0) target = $region21
    $region20: #{simple_res_net_forward.1} parent=1 // pred_region
      _
    $region21: #{simple_res_net_forward.1} parent=1 // pred_fallthru
      _
    // Predicated region
    $region22: #{simple_res_net_forward.1} parent=1 // pred_check
      _
    $region23: #{simple_res_net_forward.1} parent=1 // pred_check_branch
      %43 = sbr.rel (0) target = $region25
    $region24: #{simple_res_net_forward.1} parent=1 // pred_region
      %45 = vsyncadd [#allocation6], 0
      %s47 = sshll.u32 %s5, 4
      %s48 = int_to_ptr.hbm [resolvable:$true] %s47
      %s49 = sshll.u32 [#allocation7], 4
      %s50 = int_to_ptr.vmem [resolvable:$true] %s49
      %52 = dma.hbm_to_vmem [thread:$0]  %s48, 64, %s50, [#allocation6]
    $region25: #{simple_res_net_forward.1} parent=1 // pred_fallthru
      _
    // Predicated region
    $region26: #{simple_res_net_forward.1} parent=1 // pred_check
      _
    $region27: #{simple_res_net_forward.1} parent=1 // pred_check_branch
      %54 = sbr.rel (0) target = $region29
    $region28: #{simple_res_net_forward.1} parent=1 // pred_region
      %56 = dma.done [#allocation3], 128
    $region29: #{simple_res_net_forward.1} parent=1 // pred_fallthru
      _
    // Predicated region
    $region30: #{simple_res_net_forward.1} parent=1 // pred_check
      _
    $region31: #{simple_res_net_forward.1} parent=1 // pred_check_branch
      %58 = sbr.rel (0) target = $region33
    $region32: #{simple_res_net_forward.1} parent=1 // pred_region
      %60 = dma.done [#allocation6], 128
    $region33: #{simple_res_net_forward.1} parent=1 // pred_fallthru
      _
    // Predicated region
    $region34: #{simple_res_net_forward.1} parent=1 // pred_check
      _
    $region35: #{simple_res_net_forward.1} parent=1 // pred_check_branch
      %62 = sbr.rel (0) target = $region37
    $region36: #{simple_res_net_forward.1} parent=1 // pred_region
      %64 = dma.done [#allocation6], 64
    $region37: #{simple_res_net_forward.1} parent=1 // pred_fallthru
      _
    %v65 = vld [vmem:[%s0] sm:$0xff]
    %v66 = vld [vmem:[#allocation7] sm:$0x7]
    %v67 = vld [vmem:[#allocation2] sm:$0x3f]
    %v68 = vld [vmem:[#allocation5] sm:$0x3f]
    %v69 = vperm.slane %v66, 0
    %vm70 = vcmask 48128
    %v72 = vsel %vm70, %v65, 0
    %vm74 = vcmask 1045504
    %v76 = vsel %vm74, %v68, 0
    %78 = vmatpush.msra.mxu0 0.0
    %79 = vmatpush.msra.mxu0 0.0
    %80 = vmatpush.msra.mxu0 0.0
    %81 = vmatpush.msra.mxu0 0.0
    %82 = vmatpush.msra.mxu0 0.0
    %83 = vmatpush.msra.mxu0 0.0
    %84 = vmatpush.msra.mxu0 0.0
    %85 = vmatpush.msra.mxu0 0.0
    %86 = vmatpush.msra.mxu0 0.0
    %87 = vmatpush.msra.mxu0 0.0
    %88 = vmatpush.msra.mxu0 0.0
    %89 = vmatpush.msra.mxu0 0.0
    %90 = vmatpush.msra.mxu0 0.0
    %91 = vmatpush.msra.mxu0 0.0
    %92 = vmatpush.msra.mxu0 0.0
    %v93 = vand.u32 %v76, 4294901760
    %94 = vmatpush.msra.mxu0 %v93
    %v95 = vand.u32 %v72, 4294901760
    %v96 = vsub.f32 %v72, %v95
    %v97 = vand.u32 %v96, 4294901760
    %v98 = vsub.f32 %v96, %v97
    %v99 = vand.u32 %v98, 4294901760
    %100 = vmatmul.f32.gmra.mxu0 %v99
    %v101 = vpop.f32.mrf.mxu0
    %v102 = vadd.f32 %v69, %v101
    %103 = vdwg.mxu0
    %104 = vmatpush.msra.mxu0 0.0
    %105 = vmatpush.msra.mxu0 0.0
    %106 = vmatpush.msra.mxu0 0.0
    %107 = vmatpush.msra.mxu0 0.0
    %108 = vmatpush.msra.mxu0 0.0
    %109 = vmatpush.msra.mxu0 0.0
    %110 = vmatpush.msra.mxu0 0.0
    %111 = vmatpush.msra.mxu0 0.0
    %112 = vmatpush.msra.mxu0 0.0
    %113 = vmatpush.msra.mxu0 0.0
    %114 = vmatpush.msra.mxu0 0.0
    %115 = vmatpush.msra.mxu0 0.0
    %116 = vmatpush.msra.mxu0 0.0
    %117 = vmatpush.msra.mxu0 0.0
    %118 = vmatpush.msra.mxu0 0.0
    %v119 = vand.u32 %v76, 4294901760
    %v120 = vsub.f32 %v76, %v119
    %v121 = vand.u32 %v120, 4294901760
    %v122 = vsub.f32 %v120, %v121
    %v123 = vand.u32 %v122, 4294901760
    %124 = vmatpush.msra.mxu0 %v123
    %v125 = vand.u32 %v72, 4294901760
    %126 = vmatmul.f32.gmra.mxu0 %v125
    %v127 = vpop.f32.mrf.mxu0
    %v128 = vadd.f32 %v102, %v127
    %129 = vdwg.mxu0
    %130 = vmatpush.msra.mxu0 0.0
    %131 = vmatpush.msra.mxu0 0.0
    %132 = vmatpush.msra.mxu0 0.0
    %133 = vmatpush.msra.mxu0 0.0
    %134 = vmatpush.msra.mxu0 0.0
    %135 = vmatpush.msra.mxu0 0.0
    %136 = vmatpush.msra.mxu0 0.0
    %137 = vmatpush.msra.mxu0 0.0
    %138 = vmatpush.msra.mxu0 0.0
    %139 = vmatpush.msra.mxu0 0.0
    %140 = vmatpush.msra.mxu0 0.0
    %141 = vmatpush.msra.mxu0 0.0
    %142 = vmatpush.msra.mxu0 0.0
    %143 = vmatpush.msra.mxu0 0.0
    %144 = vmatpush.msra.mxu0 0.0
    %v145 = vand.u32 %v76, 4294901760
    %v146 = vsub.f32 %v76, %v145
    %147 = vmatpush.msra.mxu0 %v146
    %v148 = vand.u32 %v72, 4294901760
    %v149 = vsub.f32 %v72, %v148
    %150 = vmatmul.f32.gmra.mxu0 %v149
    %v151 = vpop.f32.mrf.mxu0
    %v152 = vadd.f32 %v128, %v151
    %153 = vdwg.mxu0
    %154 = vmatpush.msra.mxu0 0.0
    %155 = vmatpush.msra.mxu0 0.0
    %156 = vmatpush.msra.mxu0 0.0
    %157 = vmatpush.msra.mxu0 0.0
    %158 = vmatpush.msra.mxu0 0.0
    %159 = vmatpush.msra.mxu0 0.0
    %160 = vmatpush.msra.mxu0 0.0
    %161 = vmatpush.msra.mxu0 0.0
    %162 = vmatpush.msra.mxu0 0.0
    %163 = vmatpush.msra.mxu0 0.0
    %164 = vmatpush.msra.mxu0 0.0
    %165 = vmatpush.msra.mxu0 0.0
    %166 = vmatpush.msra.mxu0 0.0
    %167 = vmatpush.msra.mxu0 0.0
    %168 = vmatpush.msra.mxu0 0.0
    %v169 = vand.u32 %v76, 4294901760
    %170 = vmatpush.msra.mxu0 %v169
    %v171 = vand.u32 %v72, 4294901760
    %v172 = vsub.f32 %v72, %v171
    %v173 = vand.u32 %v172, 4294901760
    %174 = vmatmul.f32.gmra.mxu0 %v173
    %v175 = vpop.f32.mrf.mxu0
    %v176 = vadd.f32 %v152, %v175
    %177 = vdwg.mxu0
    %178 = vmatpush.msra.mxu0 0.0
    %179 = vmatpush.msra.mxu0 0.0
    %180 = vmatpush.msra.mxu0 0.0
    %181 = vmatpush.msra.mxu0 0.0
    %182 = vmatpush.msra.mxu0 0.0
    %183 = vmatpush.msra.mxu0 0.0
    %184 = vmatpush.msra.mxu0 0.0
    %185 = vmatpush.msra.mxu0 0.0
    %186 = vmatpush.msra.mxu0 0.0
    %187 = vmatpush.msra.mxu0 0.0
    %188 = vmatpush.msra.mxu0 0.0
    %189 = vmatpush.msra.mxu0 0.0
    %190 = vmatpush.msra.mxu0 0.0
    %191 = vmatpush.msra.mxu0 0.0
    %192 = vmatpush.msra.mxu0 0.0
    %v193 = vand.u32 %v76, 4294901760
    %v194 = vsub.f32 %v76, %v193
    %v195 = vand.u32 %v194, 4294901760
    %196 = vmatpush.msra.mxu0 %v195
    %v197 = vand.u32 %v72, 4294901760
    %198 = vmatmul.f32.gmra.mxu0 %v197
    %v199 = vpop.f32.mrf.mxu0
    %v200 = vadd.f32 %v176, %v199
    %201 = vdwg.mxu0
    %202 = vmatpush.msra.mxu0 0.0
    %203 = vmatpush.msra.mxu0 0.0
    %204 = vmatpush.msra.mxu0 0.0
    %205 = vmatpush.msra.mxu0 0.0
    %206 = vmatpush.msra.mxu0 0.0
    %207 = vmatpush.msra.mxu0 0.0
    %208 = vmatpush.msra.mxu0 0.0
    %209 = vmatpush.msra.mxu0 0.0
    %210 = vmatpush.msra.mxu0 0.0
    %211 = vmatpush.msra.mxu0 0.0
    %212 = vmatpush.msra.mxu0 0.0
    %213 = vmatpush.msra.mxu0 0.0
    %214 = vmatpush.msra.mxu0 0.0
    %215 = vmatpush.msra.mxu0 0.0
    %216 = vmatpush.msra.mxu0 0.0
    %v217 = vand.u32 %v76, 4294901760
    %218 = vmatpush.msra.mxu0 %v217
    %v219 = vand.u32 %v72, 4294901760
    %220 = vmatmul.f32.gmra.mxu0 %v219
    %v221 = vpop.f32.mrf.mxu0
    %v222 = vadd.f32 %v200, %v221
    %223 = vdwg.mxu0
    %v224 = vtanh.pop %v222
    %v225 = vld [vmem:[%s3] sm:$0xff]
    %v226 = vld [vmem:[%s3 + $0x8] sm:$0xff]
    %v227 = vld [vmem:[%s3 + $0x10] sm:$0xff]
    %v228 = vld [vmem:[%s3 + $0x18] sm:$0xff]
    %v229 = vld [vmem:[%s3 + $0x20] sm:$0xff]
    %v230 = vld [vmem:[%s3 + $0x28] sm:$0xff]
    %v231 = vld [vmem:[%s3 + $0x30] sm:$0xff]
    %v232 = vld [vmem:[%s3 + $0x38] sm:$0xff]
    %v233 = vperm.slane %v66, 1
    %vm234 = vcmask 523264
    %v236 = vsel %vm234, %v224, 0
    %238 = vmatpush.msra.mxu0 0.0
    %239 = vmatpush.msra.mxu0 0.0
    %240 = vmatpush.msra.mxu0 0.0
    %241 = vmatpush.msra.mxu0 0.0
    %242 = vmatpush.msra.mxu0 0.0
    %243 = vmatpush.msra.mxu0 0.0
    %244 = vmatpush.msra.mxu0 0.0
    %245 = vmatpush.msra.mxu0 0.0
    %v246 = vand.u32 %v232, 4294901760
    %247 = vmatpush.msra.mxu0 %v246
    %v248 = vand.u32 %v231, 4294901760
    %249 = vmatpush.msra.mxu0 %v248
    %v250 = vand.u32 %v230, 4294901760
    %251 = vmatpush.msra.mxu0 %v250
    %v252 = vand.u32 %v229, 4294901760
    %253 = vmatpush.msra.mxu0 %v252
    %v254 = vand.u32 %v228, 4294901760
    %255 = vmatpush.msra.mxu0 %v254
    %v256 = vand.u32 %v227, 4294901760
    %257 = vmatpush.msra.mxu0 %v256
    %v258 = vand.u32 %v226, 4294901760
    %259 = vmatpush.msra.mxu0 %v258
    %v260 = vand.u32 %v225, 4294901760
    %261 = vmatpush.msra.mxu0 %v260
    %v262 = vand.u32 %v236, 4294901760
    %v263 = vsub.f32 %v236, %v262
    %v264 = vand.u32 %v263, 4294901760
    %v265 = vsub.f32 %v263, %v264
    %v266 = vand.u32 %v265, 4294901760
    %267 = vmatmul.f32.gmra.mxu0 %v266
    %v268 = vpop.f32.mrf.mxu0
    %v269 = vadd.f32 %v233, %v268
    %270 = vdwg.mxu0
    %271 = vmatpush.msra.mxu0 0.0
    %272 = vmatpush.msra.mxu0 0.0
    %273 = vmatpush.msra.mxu0 0.0
    %274 = vmatpush.msra.mxu0 0.0
    %275 = vmatpush.msra.mxu0 0.0
    %276 = vmatpush.msra.mxu0 0.0
    %277 = vmatpush.msra.mxu0 0.0
    %278 = vmatpush.msra.mxu0 0.0
    %v279 = vand.u32 %v232, 4294901760
    %v280 = vsub.f32 %v232, %v279
    %v281 = vand.u32 %v280, 4294901760
    %v282 = vsub.f32 %v280, %v281
    %v283 = vand.u32 %v282, 4294901760
    %284 = vmatpush.msra.mxu0 %v283
    %v285 = vand.u32 %v231, 4294901760
    %v286 = vsub.f32 %v231, %v285
    %v287 = vand.u32 %v286, 4294901760
    %v288 = vsub.f32 %v286, %v287
    %v289 = vand.u32 %v288, 4294901760
    %290 = vmatpush.msra.mxu0 %v289
    %v291 = vand.u32 %v230, 4294901760
    %v292 = vsub.f32 %v230, %v291
    %v293 = vand.u32 %v292, 4294901760
    %v294 = vsub.f32 %v292, %v293
    %v295 = vand.u32 %v294, 4294901760
    %296 = vmatpush.msra.mxu0 %v295
    %v297 = vand.u32 %v229, 4294901760
    %v298 = vsub.f32 %v229, %v297
    %v299 = vand.u32 %v298, 4294901760
    %v300 = vsub.f32 %v298, %v299
    %v301 = vand.u32 %v300, 4294901760
    %302 = vmatpush.msra.mxu0 %v301
    %v303 = vand.u32 %v228, 4294901760
    %v304 = vsub.f32 %v228, %v303
    %v305 = vand.u32 %v304, 4294901760
    %v306 = vsub.f32 %v304, %v305
    %v307 = vand.u32 %v306, 4294901760
    %308 = vmatpush.msra.mxu0 %v307
    %v309 = vand.u32 %v227, 4294901760
    %v310 = vsub.f32 %v227, %v309
    %v311 = vand.u32 %v310, 4294901760
    %v312 = vsub.f32 %v310, %v311
    %v313 = vand.u32 %v312, 4294901760
    %314 = vmatpush.msra.mxu0 %v313
    %v315 = vand.u32 %v226, 4294901760
    %v316 = vsub.f32 %v226, %v315
    %v317 = vand.u32 %v316, 4294901760
    %v318 = vsub.f32 %v316, %v317
    %v319 = vand.u32 %v318, 4294901760
    %320 = vmatpush.msra.mxu0 %v319
    %v321 = vand.u32 %v225, 4294901760
    %v322 = vsub.f32 %v225, %v321
    %v323 = vand.u32 %v322, 4294901760
    %v324 = vsub.f32 %v322, %v323
    %v325 = vand.u32 %v324, 4294901760
    %326 = vmatpush.msra.mxu0 %v325
    %v327 = vand.u32 %v236, 4294901760
    %328 = vmatmul.f32.gmra.mxu0 %v327
    %v329 = vpop.f32.mrf.mxu0
    %v330 = vadd.f32 %v269, %v329
    %331 = vdwg.mxu0
    %332 = vmatpush.msra.mxu0 0.0
    %333 = vmatpush.msra.mxu0 0.0
    %334 = vmatpush.msra.mxu0 0.0
    %335 = vmatpush.msra.mxu0 0.0
    %336 = vmatpush.msra.mxu0 0.0
    %337 = vmatpush.msra.mxu0 0.0
    %338 = vmatpush.msra.mxu0 0.0
    %339 = vmatpush.msra.mxu0 0.0
    %v340 = vand.u32 %v232, 4294901760
    %v341 = vsub.f32 %v232, %v340
    %342 = vmatpush.msra.mxu0 %v341
    %v343 = vand.u32 %v231, 4294901760
    %v344 = vsub.f32 %v231, %v343
    %345 = vmatpush.msra.mxu0 %v344
    %v346 = vand.u32 %v230, 4294901760
    %v347 = vsub.f32 %v230, %v346
    %348 = vmatpush.msra.mxu0 %v347
    %v349 = vand.u32 %v229, 4294901760
    %v350 = vsub.f32 %v229, %v349
    %351 = vmatpush.msra.mxu0 %v350
    %v352 = vand.u32 %v228, 4294901760
    %v353 = vsub.f32 %v228, %v352
    %354 = vmatpush.msra.mxu0 %v353
    %v355 = vand.u32 %v227, 4294901760
    %v356 = vsub.f32 %v227, %v355
    %357 = vmatpush.msra.mxu0 %v356
    %v358 = vand.u32 %v226, 4294901760
    %v359 = vsub.f32 %v226, %v358
    %360 = vmatpush.msra.mxu0 %v359
    %v361 = vand.u32 %v225, 4294901760
    %v362 = vsub.f32 %v225, %v361
    %363 = vmatpush.msra.mxu0 %v362
    %v364 = vand.u32 %v236, 4294901760
    %v365 = vsub.f32 %v236, %v364
    %366 = vmatmul.f32.gmra.mxu0 %v365
    %v367 = vpop.f32.mrf.mxu0
    %v368 = vadd.f32 %v330, %v367
    %369 = vdwg.mxu0
    %370 = vmatpush.msra.mxu0 0.0
    %371 = vmatpush.msra.mxu0 0.0
    %372 = vmatpush.msra.mxu0 0.0
    %373 = vmatpush.msra.mxu0 0.0
    %374 = vmatpush.msra.mxu0 0.0
    %375 = vmatpush.msra.mxu0 0.0
    %376 = vmatpush.msra.mxu0 0.0
    %377 = vmatpush.msra.mxu0 0.0
    %v378 = vand.u32 %v232, 4294901760
    %379 = vmatpush.msra.mxu0 %v378
    %v380 = vand.u32 %v231, 4294901760
    %381 = vmatpush.msra.mxu0 %v380
    %v382 = vand.u32 %v230, 4294901760
    %383 = vmatpush.msra.mxu0 %v382
    %v384 = vand.u32 %v229, 4294901760
    %385 = vmatpush.msra.mxu0 %v384
    %v386 = vand.u32 %v228, 4294901760
    %387 = vmatpush.msra.mxu0 %v386
    %v388 = vand.u32 %v227, 4294901760
    %389 = vmatpush.msra.mxu0 %v388
    %v390 = vand.u32 %v226, 4294901760
    %391 = vmatpush.msra.mxu0 %v390
    %v392 = vand.u32 %v225, 4294901760
    %393 = vmatpush.msra.mxu0 %v392
    %v394 = vand.u32 %v236, 4294901760
    %v395 = vsub.f32 %v236, %v394
    %v396 = vand.u32 %v395, 4294901760
    %397 = vmatmul.f32.gmra.mxu0 %v396
    %v398 = vpop.f32.mrf.mxu0
    %v399 = vadd.f32 %v368, %v398
    %400 = vdwg.mxu0
    %401 = vmatpush.msra.mxu0 0.0
    %402 = vmatpush.msra.mxu0 0.0
    %403 = vmatpush.msra.mxu0 0.0
    %404 = vmatpush.msra.mxu0 0.0
    %405 = vmatpush.msra.mxu0 0.0
    %406 = vmatpush.msra.mxu0 0.0
    %407 = vmatpush.msra.mxu0 0.0
    %408 = vmatpush.msra.mxu0 0.0
    %v409 = vand.u32 %v232, 4294901760
    %v410 = vsub.f32 %v232, %v409
    %v411 = vand.u32 %v410, 4294901760
    %412 = vmatpush.msra.mxu0 %v411
    %v413 = vand.u32 %v231, 4294901760
    %v414 = vsub.f32 %v231, %v413
    %v415 = vand.u32 %v414, 4294901760
    %416 = vmatpush.msra.mxu0 %v415
    %v417 = vand.u32 %v230, 4294901760
    %v418 = vsub.f32 %v230, %v417
    %v419 = vand.u32 %v418, 4294901760
    %420 = vmatpush.msra.mxu0 %v419
    %v421 = vand.u32 %v229, 4294901760
    %v422 = vsub.f32 %v229, %v421
    %v423 = vand.u32 %v422, 4294901760
    %424 = vmatpush.msra.mxu0 %v423
    %v425 = vand.u32 %v228, 4294901760
    %v426 = vsub.f32 %v228, %v425
    %v427 = vand.u32 %v426, 4294901760
    %428 = vmatpush.msra.mxu0 %v427
    %v429 = vand.u32 %v227, 4294901760
    %v430 = vsub.f32 %v227, %v429
    %v431 = vand.u32 %v430, 4294901760
    %432 = vmatpush.msra.mxu0 %v431
    %v433 = vand.u32 %v226, 4294901760
    %v434 = vsub.f32 %v226, %v433
    %v435 = vand.u32 %v434, 4294901760
    %436 = vmatpush.msra.mxu0 %v435
    %v437 = vand.u32 %v225, 4294901760
    %v438 = vsub.f32 %v225, %v437
    %v439 = vand.u32 %v438, 4294901760
    %440 = vmatpush.msra.mxu0 %v439
    %v441 = vand.u32 %v236, 4294901760
    %442 = vmatmul.f32.gmra.mxu0 %v441
    %v443 = vpop.f32.mrf.mxu0
    %v444 = vadd.f32 %v399, %v443
    %445 = vdwg.mxu0
    %446 = vmatpush.msra.mxu0 0.0
    %447 = vmatpush.msra.mxu0 0.0
    %448 = vmatpush.msra.mxu0 0.0
    %449 = vmatpush.msra.mxu0 0.0
    %450 = vmatpush.msra.mxu0 0.0
    %451 = vmatpush.msra.mxu0 0.0
    %452 = vmatpush.msra.mxu0 0.0
    %453 = vmatpush.msra.mxu0 0.0
    %v454 = vand.u32 %v232, 4294901760
    %455 = vmatpush.msra.mxu0 %v454
    %v456 = vand.u32 %v231, 4294901760
    %457 = vmatpush.msra.mxu0 %v456
    %v458 = vand.u32 %v230, 4294901760
    %459 = vmatpush.msra.mxu0 %v458
    %v460 = vand.u32 %v229, 4294901760
    %461 = vmatpush.msra.mxu0 %v460
    %v462 = vand.u32 %v228, 4294901760
    %463 = vmatpush.msra.mxu0 %v462
    %v464 = vand.u32 %v227, 4294901760
    %465 = vmatpush.msra.mxu0 %v464
    %v466 = vand.u32 %v226, 4294901760
    %467 = vmatpush.msra.mxu0 %v466
    %v468 = vand.u32 %v225, 4294901760
    %469 = vmatpush.msra.mxu0 %v468
    %v470 = vand.u32 %v236, 4294901760
    %471 = vmatmul.f32.gmra.mxu0 %v470
    %v472 = vpop.f32.mrf.mxu0
    %v473 = vadd.f32 %v444, %v472
    %474 = vdwg.mxu0
    %v475 = vtanh.pop %v473
    %v476 = vld [vmem:[%s4] sm:$0xff]
    %v477 = vld [vmem:[%s4 + $0x8] sm:$0xff]
    %v478 = vld [vmem:[%s4 + $0x10] sm:$0xff]
    %v479 = vld [vmem:[%s4 + $0x18] sm:$0xff]
    %v480 = vld [vmem:[%s4 + $0x20] sm:$0xff]
    %v481 = vld [vmem:[%s4 + $0x28] sm:$0xff]
    %v482 = vld [vmem:[%s4 + $0x30] sm:$0xff]
    %v483 = vld [vmem:[%s4 + $0x38] sm:$0xff]
    %v484 = vperm.slane %v66, 2
    %v486 = vsel %vm234, %v475, 0
    %488 = vmatpush.msra.mxu0 0.0
    %489 = vmatpush.msra.mxu0 0.0
    %490 = vmatpush.msra.mxu0 0.0
    %491 = vmatpush.msra.mxu0 0.0
    %492 = vmatpush.msra.mxu0 0.0
    %493 = vmatpush.msra.mxu0 0.0
    %494 = vmatpush.msra.mxu0 0.0
    %495 = vmatpush.msra.mxu0 0.0
    %v496 = vand.u32 %v483, 4294901760
    %497 = vmatpush.msra.mxu0 %v496
    %v498 = vand.u32 %v482, 4294901760
    %499 = vmatpush.msra.mxu0 %v498
    %v500 = vand.u32 %v481, 4294901760
    %501 = vmatpush.msra.mxu0 %v500
    %v502 = vand.u32 %v480, 4294901760
    %503 = vmatpush.msra.mxu0 %v502
    %v504 = vand.u32 %v479, 4294901760
    %505 = vmatpush.msra.mxu0 %v504
    %v506 = vand.u32 %v478, 4294901760
    %507 = vmatpush.msra.mxu0 %v506
    %v508 = vand.u32 %v477, 4294901760
    %509 = vmatpush.msra.mxu0 %v508
    %v510 = vand.u32 %v476, 4294901760
    %511 = vmatpush.msra.mxu0 %v510
    %v512 = vand.u32 %v486, 4294901760
    %v513 = vsub.f32 %v486, %v512
    %v514 = vand.u32 %v513, 4294901760
    %v515 = vsub.f32 %v513, %v514
    %v516 = vand.u32 %v515, 4294901760
    %517 = vmatmul.f32.gmra.mxu0 %v516
    %v518 = vpop.f32.mrf.mxu0
    %v519 = vadd.f32 %v484, %v518
    %520 = vdwg.mxu0
    %521 = vmatpush.msra.mxu0 0.0
    %522 = vmatpush.msra.mxu0 0.0
    %523 = vmatpush.msra.mxu0 0.0
    %524 = vmatpush.msra.mxu0 0.0
    %525 = vmatpush.msra.mxu0 0.0
    %526 = vmatpush.msra.mxu0 0.0
    %527 = vmatpush.msra.mxu0 0.0
    %528 = vmatpush.msra.mxu0 0.0
    %v529 = vand.u32 %v483, 4294901760
    %v530 = vsub.f32 %v483, %v529
    %v531 = vand.u32 %v530, 4294901760
    %v532 = vsub.f32 %v530, %v531
    %v533 = vand.u32 %v532, 4294901760
    %534 = vmatpush.msra.mxu0 %v533
    %v535 = vand.u32 %v482, 4294901760
    %v536 = vsub.f32 %v482, %v535
    %v537 = vand.u32 %v536, 4294901760
    %v538 = vsub.f32 %v536, %v537
    %v539 = vand.u32 %v538, 4294901760
    %540 = vmatpush.msra.mxu0 %v539
    %v541 = vand.u32 %v481, 4294901760
    %v542 = vsub.f32 %v481, %v541
    %v543 = vand.u32 %v542, 4294901760
    %v544 = vsub.f32 %v542, %v543
    %v545 = vand.u32 %v544, 4294901760
    %546 = vmatpush.msra.mxu0 %v545
    %v547 = vand.u32 %v480, 4294901760
    %v548 = vsub.f32 %v480, %v547
    %v549 = vand.u32 %v548, 4294901760
    %v550 = vsub.f32 %v548, %v549
    %v551 = vand.u32 %v550, 4294901760
    %552 = vmatpush.msra.mxu0 %v551
    %v553 = vand.u32 %v479, 4294901760
    %v554 = vsub.f32 %v479, %v553
    %v555 = vand.u32 %v554, 4294901760
    %v556 = vsub.f32 %v554, %v555
    %v557 = vand.u32 %v556, 4294901760
    %558 = vmatpush.msra.mxu0 %v557
    %v559 = vand.u32 %v478, 4294901760
    %v560 = vsub.f32 %v478, %v559
    %v561 = vand.u32 %v560, 4294901760
    %v562 = vsub.f32 %v560, %v561
    %v563 = vand.u32 %v562, 4294901760
    %564 = vmatpush.msra.mxu0 %v563
    %v565 = vand.u32 %v477, 4294901760
    %v566 = vsub.f32 %v477, %v565
    %v567 = vand.u32 %v566, 4294901760
    %v568 = vsub.f32 %v566, %v567
    %v569 = vand.u32 %v568, 4294901760
    %570 = vmatpush.msra.mxu0 %v569
    %v571 = vand.u32 %v476, 4294901760
    %v572 = vsub.f32 %v476, %v571
    %v573 = vand.u32 %v572, 4294901760
    %v574 = vsub.f32 %v572, %v573
    %v575 = vand.u32 %v574, 4294901760
    %576 = vmatpush.msra.mxu0 %v575
    %v577 = vand.u32 %v486, 4294901760
    %578 = vmatmul.f32.gmra.mxu0 %v577
    %v579 = vpop.f32.mrf.mxu0
    %v580 = vadd.f32 %v519, %v579
    %581 = vdwg.mxu0
    %582 = vmatpush.msra.mxu0 0.0
    %583 = vmatpush.msra.mxu0 0.0
    %584 = vmatpush.msra.mxu0 0.0
    %585 = vmatpush.msra.mxu0 0.0
    %586 = vmatpush.msra.mxu0 0.0
    %587 = vmatpush.msra.mxu0 0.0
    %588 = vmatpush.msra.mxu0 0.0
    %589 = vmatpush.msra.mxu0 0.0
    %v590 = vand.u32 %v483, 4294901760
    %v591 = vsub.f32 %v483, %v590
    %592 = vmatpush.msra.mxu0 %v591
    %v593 = vand.u32 %v482, 4294901760
    %v594 = vsub.f32 %v482, %v593
    %595 = vmatpush.msra.mxu0 %v594
    %v596 = vand.u32 %v481, 4294901760
    %v597 = vsub.f32 %v481, %v596
    %598 = vmatpush.msra.mxu0 %v597
    %v599 = vand.u32 %v480, 4294901760
    %v600 = vsub.f32 %v480, %v599
    %601 = vmatpush.msra.mxu0 %v600
    %v602 = vand.u32 %v479, 4294901760
    %v603 = vsub.f32 %v479, %v602
    %604 = vmatpush.msra.mxu0 %v603
    %v605 = vand.u32 %v478, 4294901760
    %v606 = vsub.f32 %v478, %v605
    %607 = vmatpush.msra.mxu0 %v606
    %v608 = vand.u32 %v477, 4294901760
    %v609 = vsub.f32 %v477, %v608
    %610 = vmatpush.msra.mxu0 %v609
    %v611 = vand.u32 %v476, 4294901760
    %v612 = vsub.f32 %v476, %v611
    %613 = vmatpush.msra.mxu0 %v612
    %v614 = vand.u32 %v486, 4294901760
    %v615 = vsub.f32 %v486, %v614
    %616 = vmatmul.f32.gmra.mxu0 %v615
    %v617 = vpop.f32.mrf.mxu0
    %v618 = vadd.f32 %v580, %v617
    %619 = vdwg.mxu0
    %620 = vmatpush.msra.mxu0 0.0
    %621 = vmatpush.msra.mxu0 0.0
    %622 = vmatpush.msra.mxu0 0.0
    %623 = vmatpush.msra.mxu0 0.0
    %624 = vmatpush.msra.mxu0 0.0
    %625 = vmatpush.msra.mxu0 0.0
    %626 = vmatpush.msra.mxu0 0.0
    %627 = vmatpush.msra.mxu0 0.0
    %v628 = vand.u32 %v483, 4294901760
    %629 = vmatpush.msra.mxu0 %v628
    %v630 = vand.u32 %v482, 4294901760
    %631 = vmatpush.msra.mxu0 %v630
    %v632 = vand.u32 %v481, 4294901760
    %633 = vmatpush.msra.mxu0 %v632
    %v634 = vand.u32 %v480, 4294901760
    %635 = vmatpush.msra.mxu0 %v634
    %v636 = vand.u32 %v479, 4294901760
    %637 = vmatpush.msra.mxu0 %v636
    %v638 = vand.u32 %v478, 4294901760
    %639 = vmatpush.msra.mxu0 %v638
    %v640 = vand.u32 %v477, 4294901760
    %641 = vmatpush.msra.mxu0 %v640
    %v642 = vand.u32 %v476, 4294901760
    %643 = vmatpush.msra.mxu0 %v642
    %v644 = vand.u32 %v486, 4294901760
    %v645 = vsub.f32 %v486, %v644
    %v646 = vand.u32 %v645, 4294901760
    %647 = vmatmul.f32.gmra.mxu0 %v646
    %v648 = vpop.f32.mrf.mxu0
    %v649 = vadd.f32 %v618, %v648
    %650 = vdwg.mxu0
    %651 = vmatpush.msra.mxu0 0.0
    %652 = vmatpush.msra.mxu0 0.0
    %653 = vmatpush.msra.mxu0 0.0
    %654 = vmatpush.msra.mxu0 0.0
    %655 = vmatpush.msra.mxu0 0.0
    %656 = vmatpush.msra.mxu0 0.0
    %657 = vmatpush.msra.mxu0 0.0
    %658 = vmatpush.msra.mxu0 0.0
    %v659 = vand.u32 %v483, 4294901760
    %v660 = vsub.f32 %v483, %v659
    %v661 = vand.u32 %v660, 4294901760
    %662 = vmatpush.msra.mxu0 %v661
    %v663 = vand.u32 %v482, 4294901760
    %v664 = vsub.f32 %v482, %v663
    %v665 = vand.u32 %v664, 4294901760
    %666 = vmatpush.msra.mxu0 %v665
    %v667 = vand.u32 %v481, 4294901760
    %v668 = vsub.f32 %v481, %v667
    %v669 = vand.u32 %v668, 4294901760
    %670 = vmatpush.msra.mxu0 %v669
    %v671 = vand.u32 %v480, 4294901760
    %v672 = vsub.f32 %v480, %v671
    %v673 = vand.u32 %v672, 4294901760
    %674 = vmatpush.msra.mxu0 %v673
    %v675 = vand.u32 %v479, 4294901760
    %v676 = vsub.f32 %v479, %v675
    %v677 = vand.u32 %v676, 4294901760
    %678 = vmatpush.msra.mxu0 %v677
    %v679 = vand.u32 %v478, 4294901760
    %v680 = vsub.f32 %v478, %v679
    %v681 = vand.u32 %v680, 4294901760
    %682 = vmatpush.msra.mxu0 %v681
    %v683 = vand.u32 %v477, 4294901760
    %v684 = vsub.f32 %v477, %v683
    %v685 = vand.u32 %v684, 4294901760
    %686 = vmatpush.msra.mxu0 %v685
    %v687 = vand.u32 %v476, 4294901760
    %v688 = vsub.f32 %v476, %v687
    %v689 = vand.u32 %v688, 4294901760
    %690 = vmatpush.msra.mxu0 %v689
    %v691 = vand.u32 %v486, 4294901760
    %692 = vmatmul.f32.gmra.mxu0 %v691
    %v693 = vpop.f32.mrf.mxu0
    %v694 = vadd.f32 %v649, %v693
    %695 = vdwg.mxu0
    %696 = vmatpush.msra.mxu0 0.0
    %697 = vmatpush.msra.mxu0 0.0
    %698 = vmatpush.msra.mxu0 0.0
    %699 = vmatpush.msra.mxu0 0.0
    %700 = vmatpush.msra.mxu0 0.0
    %701 = vmatpush.msra.mxu0 0.0
    %702 = vmatpush.msra.mxu0 0.0
    %703 = vmatpush.msra.mxu0 0.0
    %v704 = vand.u32 %v483, 4294901760
    %705 = vmatpush.msra.mxu0 %v704
    %v706 = vand.u32 %v482, 4294901760
    %707 = vmatpush.msra.mxu0 %v706
    %v708 = vand.u32 %v481, 4294901760
    %709 = vmatpush.msra.mxu0 %v708
    %v710 = vand.u32 %v480, 4294901760
    %711 = vmatpush.msra.mxu0 %v710
    %v712 = vand.u32 %v479, 4294901760
    %713 = vmatpush.msra.mxu0 %v712
    %v714 = vand.u32 %v478, 4294901760
    %715 = vmatpush.msra.mxu0 %v714
    %v716 = vand.u32 %v477, 4294901760
    %717 = vmatpush.msra.mxu0 %v716
    %v718 = vand.u32 %v476, 4294901760
    %719 = vmatpush.msra.mxu0 %v718
    %v720 = vand.u32 %v486, 4294901760
    %721 = vmatmul.f32.gmra.mxu0 %v720
    %v722 = vpop.f32.mrf.mxu0
    %v723 = vadd.f32 %v694, %v722
    %724 = vdwg.mxu0
    %v726 = vsel %vm74, %v67, 0
    %728 = vmatpush.msra.mxu0 0.0
    %729 = vmatpush.msra.mxu0 0.0
    %730 = vmatpush.msra.mxu0 0.0
    %731 = vmatpush.msra.mxu0 0.0
    %732 = vmatpush.msra.mxu0 0.0
    %733 = vmatpush.msra.mxu0 0.0
    %734 = vmatpush.msra.mxu0 0.0
    %735 = vmatpush.msra.mxu0 0.0
    %736 = vmatpush.msra.mxu0 0.0
    %737 = vmatpush.msra.mxu0 0.0
    %738 = vmatpush.msra.mxu0 0.0
    %739 = vmatpush.msra.mxu0 0.0
    %740 = vmatpush.msra.mxu0 0.0
    %741 = vmatpush.msra.mxu0 0.0
    %742 = vmatpush.msra.mxu0 0.0
    %v743 = vand.u32 %v726, 4294901760
    %744 = vmatpush.msra.mxu0 %v743
    %v745 = vand.u32 %v72, 4294901760
    %v746 = vsub.f32 %v72, %v745
    %v747 = vand.u32 %v746, 4294901760
    %v748 = vsub.f32 %v746, %v747
    %v749 = vand.u32 %v748, 4294901760
    %750 = vmatmul.f32.gmra.mxu0 %v749
    %v751 = vpop.f32.mrf.mxu0
    %v752 = vadd.f32 %v723, %v751
    %753 = vdwg.mxu0
    %754 = vmatpush.msra.mxu0 0.0
    %755 = vmatpush.msra.mxu0 0.0
    %756 = vmatpush.msra.mxu0 0.0
    %757 = vmatpush.msra.mxu0 0.0
    %758 = vmatpush.msra.mxu0 0.0
    %759 = vmatpush.msra.mxu0 0.0
    %760 = vmatpush.msra.mxu0 0.0
    %761 = vmatpush.msra.mxu0 0.0
    %762 = vmatpush.msra.mxu0 0.0
    %763 = vmatpush.msra.mxu0 0.0
    %764 = vmatpush.msra.mxu0 0.0
    %765 = vmatpush.msra.mxu0 0.0
    %766 = vmatpush.msra.mxu0 0.0
    %767 = vmatpush.msra.mxu0 0.0
    %768 = vmatpush.msra.mxu0 0.0
    %v769 = vand.u32 %v726, 4294901760
    %v770 = vsub.f32 %v726, %v769
    %v771 = vand.u32 %v770, 4294901760
    %v772 = vsub.f32 %v770, %v771
    %v773 = vand.u32 %v772, 4294901760
    %774 = vmatpush.msra.mxu0 %v773
    %v775 = vand.u32 %v72, 4294901760
    %776 = vmatmul.f32.gmra.mxu0 %v775
    %v777 = vpop.f32.mrf.mxu0
    %v778 = vadd.f32 %v752, %v777
    %779 = vdwg.mxu0
    %780 = vmatpush.msra.mxu0 0.0
    %781 = vmatpush.msra.mxu0 0.0
    %782 = vmatpush.msra.mxu0 0.0
    %783 = vmatpush.msra.mxu0 0.0
    %784 = vmatpush.msra.mxu0 0.0
    %785 = vmatpush.msra.mxu0 0.0
    %786 = vmatpush.msra.mxu0 0.0
    %787 = vmatpush.msra.mxu0 0.0
    %788 = vmatpush.msra.mxu0 0.0
    %789 = vmatpush.msra.mxu0 0.0
    %790 = vmatpush.msra.mxu0 0.0
    %791 = vmatpush.msra.mxu0 0.0
    %792 = vmatpush.msra.mxu0 0.0
    %793 = vmatpush.msra.mxu0 0.0
    %794 = vmatpush.msra.mxu0 0.0
    %v795 = vand.u32 %v726, 4294901760
    %v796 = vsub.f32 %v726, %v795
    %797 = vmatpush.msra.mxu0 %v796
    %v798 = vand.u32 %v72, 4294901760
    %v799 = vsub.f32 %v72, %v798
    %800 = vmatmul.f32.gmra.mxu0 %v799
    %v801 = vpop.f32.mrf.mxu0
    %v802 = vadd.f32 %v778, %v801
    %803 = vdwg.mxu0
    %804 = vmatpush.msra.mxu0 0.0
    %805 = vmatpush.msra.mxu0 0.0
    %806 = vmatpush.msra.mxu0 0.0
    %807 = vmatpush.msra.mxu0 0.0
    %808 = vmatpush.msra.mxu0 0.0
    %809 = vmatpush.msra.mxu0 0.0
    %810 = vmatpush.msra.mxu0 0.0
    %811 = vmatpush.msra.mxu0 0.0
    %812 = vmatpush.msra.mxu0 0.0
    %813 = vmatpush.msra.mxu0 0.0
    %814 = vmatpush.msra.mxu0 0.0
    %815 = vmatpush.msra.mxu0 0.0
    %816 = vmatpush.msra.mxu0 0.0
    %817 = vmatpush.msra.mxu0 0.0
    %818 = vmatpush.msra.mxu0 0.0
    %v819 = vand.u32 %v726, 4294901760
    %820 = vmatpush.msra.mxu0 %v819
    %v821 = vand.u32 %v72, 4294901760
    %v822 = vsub.f32 %v72, %v821
    %v823 = vand.u32 %v822, 4294901760
    %824 = vmatmul.f32.gmra.mxu0 %v823
    %v825 = vpop.f32.mrf.mxu0
    %v826 = vadd.f32 %v802, %v825
    %827 = vdwg.mxu0
    %828 = vmatpush.msra.mxu0 0.0
    %829 = vmatpush.msra.mxu0 0.0
    %830 = vmatpush.msra.mxu0 0.0
    %831 = vmatpush.msra.mxu0 0.0
    %832 = vmatpush.msra.mxu0 0.0
    %833 = vmatpush.msra.mxu0 0.0
    %834 = vmatpush.msra.mxu0 0.0
    %835 = vmatpush.msra.mxu0 0.0
    %836 = vmatpush.msra.mxu0 0.0
    %837 = vmatpush.msra.mxu0 0.0
    %838 = vmatpush.msra.mxu0 0.0
    %839 = vmatpush.msra.mxu0 0.0
    %840 = vmatpush.msra.mxu0 0.0
    %841 = vmatpush.msra.mxu0 0.0
    %842 = vmatpush.msra.mxu0 0.0
    %v843 = vand.u32 %v726, 4294901760
    %v844 = vsub.f32 %v726, %v843
    %v845 = vand.u32 %v844, 4294901760
    %846 = vmatpush.msra.mxu0 %v845
    %v847 = vand.u32 %v72, 4294901760
    %848 = vmatmul.f32.gmra.mxu0 %v847
    %v849 = vpop.f32.mrf.mxu0
    %v850 = vadd.f32 %v826, %v849
    %851 = vdwg.mxu0
    %852 = vmatpush.msra.mxu0 0.0
    %853 = vmatpush.msra.mxu0 0.0
    %854 = vmatpush.msra.mxu0 0.0
    %855 = vmatpush.msra.mxu0 0.0
    %856 = vmatpush.msra.mxu0 0.0
    %857 = vmatpush.msra.mxu0 0.0
    %858 = vmatpush.msra.mxu0 0.0
    %859 = vmatpush.msra.mxu0 0.0
    %860 = vmatpush.msra.mxu0 0.0
    %861 = vmatpush.msra.mxu0 0.0
    %862 = vmatpush.msra.mxu0 0.0
    %863 = vmatpush.msra.mxu0 0.0
    %864 = vmatpush.msra.mxu0 0.0
    %865 = vmatpush.msra.mxu0 0.0
    %866 = vmatpush.msra.mxu0 0.0
    %v867 = vand.u32 %v726, 4294901760
    %868 = vmatpush.msra.mxu0 %v867
    %v869 = vand.u32 %v72, 4294901760
    %870 = vmatmul.f32.gmra.mxu0 %v869
    %v871 = vpop.f32.mrf.mxu0
    %v872 = vadd.f32 %v850, %v871
    %873 = vdwg.mxu0
    %vm874 = vcmask 39936
    %875 = vst.msk [vmem:[#allocation8] sm:$0xff] %vm874, %v872
    // Predicated region
    $region38: #{simple_res_net_forward.1} parent=1 // pred_check
      _
    $region39: #{simple_res_net_forward.1} parent=1 // pred_check_branch
      %877 = sbr.rel (0) target = $region41
    $region40: #{simple_res_net_forward.1} parent=1 // pred_region
      %879 = vsyncadd [#allocation4], 0
      %s881 = sshll.u32 [#allocation8], 4
      %s882 = int_to_ptr.vmem [resolvable:$true] %s881
      %s883 = sshll.u32 %s6, 4
      %s884 = int_to_ptr.hbm [resolvable:$true] %s883
      %886 = dma.vmem_to_hbm [thread:$0]  %s882, 128, %s884, [#allocation4]
    $region41: #{simple_res_net_forward.1} parent=1 // pred_fallthru
      _
    // Predicated region
    $region42: #{simple_res_net_forward.1} parent=1 // pred_check
      _
    $region43: #{simple_res_net_forward.1} parent=1 // pred_check_branch
      %888 = sbr.rel (0) target = $region45
    $region44: #{simple_res_net_forward.1} parent=1 // pred_region
      %890 = dma.done [#allocation4], 128
    $region45: #{simple_res_net_forward.1} parent=1 // pred_fallthru
      _
    %891 = vsyncpa [#allocation3], 1
    %892 = vsyncpa [#allocation6], 1
    %893 = vsyncpa [#allocation4], 1

</llo_original>
